<compile_context>
chip_gen: v7x
topology: tpu7x:2x2x1
jax: 0.10.0
libtpu: 0.0.40
codegen_flags: <defaults>
</compile_context>

<pallas_src>
import functools

import jax
import jax.numpy as jnp
from jax.experimental import pallas as pl
from jax.experimental.pallas import tpu as pltpu

_SELU_ALPHA = 1.6732632423543772
_SELU_SCALE = 1.0507009873554805

# MXU operand dtype (f32 accumulation everywhere).  bf16 is native on the
# v5e/v6e/v7x MXU and halves weight/activation VMEM+HBM traffic.
_COMPUTE_DTYPE = jnp.bfloat16


def _round_up(x: int, m: int) -> int:
    return ((x + m - 1) // m) * m


def _pad2(a, shape, dtype):
    """Zero-pad 2-D array `a` into `shape` and cast to `dtype`."""
    out = jnp.zeros(shape, dtype)
    return out.at[: a.shape[0], : a.shape[1]].set(a.astype(dtype))


def _snn_kernel(x_ref, *refs, n_layers: int):
    """Fused MLP: (Linear -> SELU) x (n_layers-1) -> Linear, one batch tile.

    refs = (w0, b0, w1, b1, ..., w_last, b_last, o_ref); weights are
    (K_pad, N_pad) in compute dtype, biases (1, N_pad) f32, all VMEM-resident.
    """
    o_ref = refs[-1]
    h = x_ref[...]                                   # (tm, Kp) compute dtype
    for l in range(n_layers):                        # static unroll over layers
        w = refs[2 * l][...]
        b = refs[2 * l + 1][...]
        y = jnp.dot(h, w, preferred_element_type=jnp.float32) + b   # f32 accumulate
        if l < n_layers - 1:
            # SELU in f32; clamp before exp so the discarded positive branch
            # never generates +inf.
            neg = _SELU_ALPHA * (jnp.exp(jnp.minimum(y, 0.0)) - 1.0)
            y = _SELU_SCALE * jnp.where(y > 0.0, y, neg)
            # AlphaDropout (eval) == identity.
            h = y.astype(w.dtype)                    # back to MXU operand dtype
        else:
            o_ref[...] = y.astype(o_ref.dtype)


def snn_forward_pallas(x, block_params, out_params):
    """x: (M, d_in) f32; weights stored transposed as (in, out); biases (out,)."""
    M, d_in = x.shape
    d_block = block_params[0][0].shape[1]
    d_out = out_params[0].shape[1]
    n_layers = len(block_params) + 1

    # Lane-dense (128-multiple) feature dims.
    Kp = _round_up(d_in, 128)
    Hp = _round_up(d_block, 128)
    Np = _round_up(d_out, 128)

    # Batch tiling: pad to a sublane multiple; cap tiles at 512 rows so large
    # batches give >=2 "parallel" grid steps (megacore on v7x) while keeping
    # per-step overhead amortized.  Padding waste is < tm rows.
    Mp = _round_up(M, 8)
    if Mp <= 512:
        tm = Mp
    else:
        tm = 512
        Mp = _round_up(Mp, tm)
    grid = (Mp // tm,)

    # Zero-pad + cast parameters (exact: padded features stay 0 through SELU).
    params = []
    for i, (w, b) in enumerate(block_params):
        kin_p = Kp if i == 0 else Hp
        params.append((_pad2(w, (kin_p, Hp), _COMPUTE_DTYPE),
                       _pad2(b.reshape(1, -1), (1, Hp), jnp.float32)))
    w_out, b_out = out_params
    params.append((_pad2(w_out, (Hp, Np), _COMPUTE_DTYPE),
                   _pad2(b_out.reshape(1, -1), (1, Np), jnp.float32)))

    xp = _pad2(x, (Mp, Kp), _COMPUTE_DTYPE)

    # Weights/biases: whole array resident in VMEM, no pipelining / no
    # double-buffering (constant across the batch grid).
    vmem_full = pl.BlockSpec(memory_space=pltpu.MemorySpace.VMEM)
    inputs = [xp]
    param_specs = []
    for wp, bp in params:
        inputs += [wp, bp]
        param_specs += [vmem_full, vmem_full]

    out = pl.pallas_call(
        functools.partial(_snn_kernel, n_layers=n_layers),
        out_shape=jax.ShapeDtypeStruct((Mp, Np), jnp.float32),
        grid_spec=pltpu.PrefetchScalarGridSpec(
            num_scalar_prefetch=0,
            grid=grid,
            in_specs=[pl.BlockSpec((tm, Kp), lambda i: (i, 0))] + param_specs,
            out_specs=pl.BlockSpec((tm, Np), lambda i: (i, 0)),
        ),
        compiler_params=pltpu.CompilerParams(
            dimension_semantics=("parallel",)),
    )(*inputs)

    return out[:M, :d_out]


snn_forward = jax.jit(snn_forward_pallas)


def init_snn_params(key, *, d_in: int, d_out: int, n_blocks: int, d_block: int):
    """Deterministic init matching nn.init.kaiming_normal_(fan_in,
    nonlinearity='linear') -> std = 1/sqrt(fan_in); biases zero.
    Weights stored transposed as (in, out) for the x @ W kernel layout."""
    params = []
    for i in range(n_blocks):
        fan_in = d_block if i else d_in
        key, sub = jax.random.split(key)
        w = jax.random.normal(sub, (fan_in, d_block), jnp.float32) / jnp.sqrt(
            jnp.float32(fan_in))
        b = jnp.zeros((d_block,), jnp.float32)
        params.append((w, b))
    key, sub = jax.random.split(key)
    w_out = jax.random.normal(sub, (d_block, d_out), jnp.float32) / jnp.sqrt(
        jnp.float32(d_block))
    b_out = jnp.zeros((d_out,), jnp.float32)
    return params, (w_out, b_out)


def _ref_forward(x, block_params, out_params):
    """Pure-JAX reference mirroring the kernel math (bf16 operands, f32 acc)."""
    h = x.astype(_COMPUTE_DTYPE)
    for (w, b) in block_params:
        y = jnp.dot(h, w.astype(_COMPUTE_DTYPE),
                    preferred_element_type=jnp.float32) + b
        neg = _SELU_ALPHA * (jnp.exp(jnp.minimum(y, 0.0)) - 1.0)
        h = (_SELU_SCALE * jnp.where(y > 0.0, y, neg)).astype(_COMPUTE_DTYPE)
    w_out, b_out = out_params
    return jnp.dot(h, w_out.astype(_COMPUTE_DTYPE),
                   preferred_element_type=jnp.float32) + b_out


if __name__ == "__main__":
    batch, d_in, d_block, d_out, n_blocks = 8, 32, 64, 16, 2

    key = jax.random.PRNGKey(0)
    key, xkey = jax.random.split(key)
    x = jax.random.normal(xkey, (batch, d_in), jnp.float32)

    block_params, out_params = init_snn_params(
        key, d_in=d_in, d_out=d_out, n_blocks=n_blocks, d_block=d_block)

    y = snn_forward(x, block_params, out_params)
    jax.block_until_ready(y)

    ref = _ref_forward(x, block_params, out_params)
    assert y.shape == (batch, d_out)
    err = float(jnp.max(jnp.abs(y - ref)))
    assert jnp.allclose(y, ref, atol=1e-4, rtol=1e-4), f"max abs err {err}"

    print("KERNEL_OK")
</pallas_src>

<mosaic_0001>
module attributes {stable_mosaic.version = 11 : i64} {
  func.func @_snn_kernel(%arg0: i32, %arg1: memref<8x128xbf16, #tpu.memory_space<vmem>>, %arg2: memref<128x128xbf16, #tpu.memory_space<vmem>>, %arg3: memref<1x128xf32, #tpu.memory_space<vmem>>, %arg4: memref<128x128xbf16, #tpu.memory_space<vmem>>, %arg5: memref<1x128xf32, #tpu.memory_space<vmem>>, %arg6: memref<128x128xbf16, #tpu.memory_space<vmem>>, %arg7: memref<1x128xf32, #tpu.memory_space<vmem>>, %arg8: memref<8x128xf32, #tpu.memory_space<vmem>>) attributes {dimension_semantics = [#tpu.dimension_semantics<parallel>], iteration_bounds = array<i64: 1>, scalar_prefetch = 0 : i64, scratch_operands = 0 : i64, tpu.core_type = #tpu.core_type<tc>, window_params = [{transform_indices = @transform_0, window_bounds = array<i64: 8, 128>}, {pipeline_mode = #tpu.pipeline_mode<synchronous>, transform_indices = @transform_1, window_bounds = array<i64: 128, 128>}, {pipeline_mode = #tpu.pipeline_mode<synchronous>, transform_indices = @transform_2, window_bounds = array<i64: 1, 128>}, {pipeline_mode = #tpu.pipeline_mode<synchronous>, transform_indices = @transform_3, window_bounds = array<i64: 128, 128>}, {pipeline_mode = #tpu.pipeline_mode<synchronous>, transform_indices = @transform_4, window_bounds = array<i64: 1, 128>}, {pipeline_mode = #tpu.pipeline_mode<synchronous>, transform_indices = @transform_5, window_bounds = array<i64: 128, 128>}, {pipeline_mode = #tpu.pipeline_mode<synchronous>, transform_indices = @transform_6, window_bounds = array<i64: 1, 128>}, {transform_indices = @transform_7, window_bounds = array<i64: 8, 128>}]} {
    %c0 = arith.constant 0 : index
    %c0_0 = arith.constant 0 : index
    %0 = vector.load %arg1[%c0, %c0_0] : memref<8x128xbf16, #tpu.memory_space<vmem>>, vector<8x128xbf16>
    %c0_1 = arith.constant 0 : index
    %c0_2 = arith.constant 0 : index
    %1 = vector.load %arg2[%c0_1, %c0_2] : memref<128x128xbf16, #tpu.memory_space<vmem>>, vector<128x128xbf16>
    %c0_3 = arith.constant 0 : index
    %c0_4 = arith.constant 0 : index
    %2 = vector.load %arg3[%c0_3, %c0_4] : memref<1x128xf32, #tpu.memory_space<vmem>>, vector<1x128xf32>
    %cst = arith.constant dense<0.000000e+00> : vector<8x128xf32>
    %3 = tpu.matmul %0, %1, %cst {dimension_numbers = #tpu.dot_dimension_numbers<[1], [0], [0], [1], [0, 0, 1, 1], [], []>} : vector<8x128xbf16>, vector<128x128xbf16>, vector<8x128xf32> -> vector<8x128xf32>
    %4 = vector.broadcast %2 : vector<1x128xf32> to vector<8x128xf32>
    %5 = arith.addf %3, %4 : vector<8x128xf32>
    %cst_5 = arith.constant 0.000000e+00 : f32
    %6 = vector.broadcast %cst_5 : f32 to vector<8x128xf32>
    %7 = arith.minimumf %5, %6 : vector<8x128xf32>
    %8 = math.exp %7 : vector<8x128xf32>
    %cst_6 = arith.constant 1.000000e+00 : f32
    %9 = vector.broadcast %cst_6 : f32 to vector<8x128xf32>
    %10 = arith.subf %8, %9 : vector<8x128xf32>
    %cst_7 = arith.constant 1.67326319 : f32
    %11 = vector.broadcast %cst_7 : f32 to vector<8x128xf32>
    %12 = arith.mulf %11, %10 : vector<8x128xf32>
    %cst_8 = arith.constant 0.000000e+00 : f32
    %13 = vector.broadcast %cst_8 : f32 to vector<8x128xf32>
    %14 = arith.cmpf ogt, %5, %13 : vector<8x128xf32>
    %15 = arith.select %14, %5, %12 : vector<8x128xi1>, vector<8x128xf32>
    %cst_9 = arith.constant 1.05070102 : f32
    %16 = vector.broadcast %cst_9 : f32 to vector<8x128xf32>
    %17 = arith.mulf %16, %15 : vector<8x128xf32>
    %18 = arith.truncf %17 : vector<8x128xf32> to vector<8x128xbf16>
    %c0_10 = arith.constant 0 : index
    %c0_11 = arith.constant 0 : index
    %19 = vector.load %arg4[%c0_10, %c0_11] : memref<128x128xbf16, #tpu.memory_space<vmem>>, vector<128x128xbf16>
    %c0_12 = arith.constant 0 : index
    %c0_13 = arith.constant 0 : index
    %20 = vector.load %arg5[%c0_12, %c0_13] : memref<1x128xf32, #tpu.memory_space<vmem>>, vector<1x128xf32>
    %cst_14 = arith.constant dense<0.000000e+00> : vector<8x128xf32>
    %21 = tpu.matmul %18, %19, %cst_14 {dimension_numbers = #tpu.dot_dimension_numbers<[1], [0], [0], [1], [0, 0, 1, 1], [], []>} : vector<8x128xbf16>, vector<128x128xbf16>, vector<8x128xf32> -> vector<8x128xf32>
    %22 = vector.broadcast %20 : vector<1x128xf32> to vector<8x128xf32>
    %23 = arith.addf %21, %22 : vector<8x128xf32>
    %cst_15 = arith.constant 0.000000e+00 : f32
    %24 = vector.broadcast %cst_15 : f32 to vector<8x128xf32>
    %25 = arith.minimumf %23, %24 : vector<8x128xf32>
    %26 = math.exp %25 : vector<8x128xf32>
    %cst_16 = arith.constant 1.000000e+00 : f32
    %27 = vector.broadcast %cst_16 : f32 to vector<8x128xf32>
    %28 = arith.subf %26, %27 : vector<8x128xf32>
    %cst_17 = arith.constant 1.67326319 : f32
    %29 = vector.broadcast %cst_17 : f32 to vector<8x128xf32>
    %30 = arith.mulf %29, %28 : vector<8x128xf32>
    %cst_18 = arith.constant 0.000000e+00 : f32
    %31 = vector.broadcast %cst_18 : f32 to vector<8x128xf32>
    %32 = arith.cmpf ogt, %23, %31 : vector<8x128xf32>
    %33 = arith.select %32, %23, %30 : vector<8x128xi1>, vector<8x128xf32>
    %cst_19 = arith.constant 1.05070102 : f32
    %34 = vector.broadcast %cst_19 : f32 to vector<8x128xf32>
    %35 = arith.mulf %34, %33 : vector<8x128xf32>
    %36 = arith.truncf %35 : vector<8x128xf32> to vector<8x128xbf16>
    %c0_20 = arith.constant 0 : index
    %c0_21 = arith.constant 0 : index
    %37 = vector.load %arg6[%c0_20, %c0_21] : memref<128x128xbf16, #tpu.memory_space<vmem>>, vector<128x128xbf16>
    %c0_22 = arith.constant 0 : index
    %c0_23 = arith.constant 0 : index
    %38 = vector.load %arg7[%c0_22, %c0_23] : memref<1x128xf32, #tpu.memory_space<vmem>>, vector<1x128xf32>
    %cst_24 = arith.constant dense<0.000000e+00> : vector<8x128xf32>
    %39 = tpu.matmul %36, %37, %cst_24 {dimension_numbers = #tpu.dot_dimension_numbers<[1], [0], [0], [1], [0, 0, 1, 1], [], []>} : vector<8x128xbf16>, vector<128x128xbf16>, vector<8x128xf32> -> vector<8x128xf32>
    %40 = vector.broadcast %38 : vector<1x128xf32> to vector<8x128xf32>
    %41 = arith.addf %39, %40 : vector<8x128xf32>
    %c0_25 = arith.constant 0 : index
    %c0_26 = arith.constant 0 : index
    %42 = vector.load %arg8[%c0_25, %c0_26] : memref<8x128xf32, #tpu.memory_space<vmem>>, vector<8x128xf32>
    tpu.vector_store %arg8[%c0_25, %c0_26], %41 {strides = array<i32>} : memref<8x128xf32, #tpu.memory_space<vmem>>, vector<8x128xf32>,
    return
  }
  func.func @transform_0(%arg0: i32) -> (i32, i32) {
    %c0_i32 = arith.constant 0 : i32
    %c0_i32_0 = arith.constant 0 : i32
    return %arg0, %c0_i32 : i32, i32
  }
  func.func @transform_1(%arg0: i32) -> (i32, i32) {
    %c0_i32 = arith.constant 0 : i32
    %c0_i32_0 = arith.constant 0 : i32
    %c0_i32_1 = arith.constant 0 : i32
    return %c0_i32, %c0_i32_0 : i32, i32
  }
  func.func @transform_2(%arg0: i32) -> (i32, i32) {
    %c0_i32 = arith.constant 0 : i32
    %c0_i32_0 = arith.constant 0 : i32
    %c0_i32_1 = arith.constant 0 : i32
    return %c0_i32, %c0_i32_0 : i32, i32
  }
  func.func @transform_3(%arg0: i32) -> (i32, i32) {
    %c0_i32 = arith.constant 0 : i32
    %c0_i32_0 = arith.constant 0 : i32
    %c0_i32_1 = arith.constant 0 : i32
    return %c0_i32, %c0_i32_0 : i32, i32
  }
  func.func @transform_4(%arg0: i32) -> (i32, i32) {
    %c0_i32 = arith.constant 0 : i32
    %c0_i32_0 = arith.constant 0 : i32
    %c0_i32_1 = arith.constant 0 : i32
    return %c0_i32, %c0_i32_0 : i32, i32
  }
  func.func @transform_5(%arg0: i32) -> (i32, i32) {
    %c0_i32 = arith.constant 0 : i32
    %c0_i32_0 = arith.constant 0 : i32
    %c0_i32_1 = arith.constant 0 : i32
    return %c0_i32, %c0_i32_0 : i32, i32
  }
  func.func @transform_6(%arg0: i32) -> (i32, i32) {
    %c0_i32 = arith.constant 0 : i32
    %c0_i32_0 = arith.constant 0 : i32
    %c0_i32_1 = arith.constant 0 : i32
    return %c0_i32, %c0_i32_0 : i32, i32
  }
  func.func @transform_7(%arg0: i32) -> (i32, i32) {
    %c0_i32 = arith.constant 0 : i32
    %c0_i32_0 = arith.constant 0 : i32
    return %arg0, %c0_i32 : i32, i32
  }
}

</mosaic_0001>

<llo_original>
// kernel: snn_forward_pallas.1
$region0: #{snn_forward_pallas.1}
  #allocation0 [shape = 'u32[]', space=smem, size = 0x4, offset = 0x4, fixed_abs, tag = 'smem constant byte address 0x4 - core index']
  #allocation1 [shape = 'u32[144,128]{1,0:T(1,128)}', space=vmem, size = 0x12000, scoped, tag = 'internal scratch']
  %s0 = inlined_call_operand.vmem [shape: bf16[8,128], index: 0, kind: input, shape index: {}]
  %s1 = inlined_call_operand.vmem [shape: bf16[128,128], index: 1, kind: input, shape index: {}]
  %s2 = inlined_call_operand.vmem [shape: f32[1,128], index: 2, kind: input, shape index: {}]
  %s3 = inlined_call_operand.vmem [shape: bf16[128,128], index: 3, kind: input, shape index: {}]
  %s4 = inlined_call_operand.vmem [shape: f32[1,128], index: 4, kind: input, shape index: {}]
  %s5 = inlined_call_operand.vmem [shape: bf16[128,128], index: 5, kind: input, shape index: {}]
  %s6 = inlined_call_operand.vmem [shape: f32[1,128], index: 6, kind: input, shape index: {}]
  %s7 = inlined_call_operand.hbm [shape: f32[8,128], index: 7, kind: output, shape index: {}]
  %s8 = sld [smem:[#allocation0]]
  $region38: #{snn_forward_pallas.1} parent=0
    _
  %s10 = ssub.s32 1, %s8
  %s11 = scalar_select 0, %s10, %s8
  $region1: #{snn_forward_pallas.1} parent=0
    #allocation2 [shape = 'u8[4096]{0}', space=vmem, size = 0x1000, scoped, tag = 'output window, operand 0, single buffered']
    #allocation3 [shape = 's32[1]{0}', space=sflag, size = 0x4, scoped, tag = 'scoped memory for snn_forward_pallas.1']
    %12 = vsyncpa [#allocation3], 0
    // Predicated region
    $region2: #{snn_forward_pallas.1} parent=1 // pred_check
      _
    $region3: #{snn_forward_pallas.1} parent=1 // pred_check_branch
      %14 = sbr.rel (0) target = $region5
    $region4: #{snn_forward_pallas.1} parent=1 // pred_region
      _
    $region5: #{snn_forward_pallas.1} parent=1 // pred_fallthru
      _
    // Predicated region
    $region6: #{snn_forward_pallas.1} parent=1 // pred_check
      _
    $region7: #{snn_forward_pallas.1} parent=1 // pred_check_branch
      %16 = sbr.rel (0) target = $region9
    $region8: #{snn_forward_pallas.1} parent=1 // pred_region
      _
    $region9: #{snn_forward_pallas.1} parent=1 // pred_fallthru
      _
    // Predicated region
    $region10: #{snn_forward_pallas.1} parent=1 // pred_check
      _
    $region11: #{snn_forward_pallas.1} parent=1 // pred_check_branch
      %18 = sbr.rel (0) target = $region13
    $region12: #{snn_forward_pallas.1} parent=1 // pred_region
      _
    $region13: #{snn_forward_pallas.1} parent=1 // pred_fallthru
      _
    // Predicated region
    $region14: #{snn_forward_pallas.1} parent=1 // pred_check
      _
    $region15: #{snn_forward_pallas.1} parent=1 // pred_check_branch
      %20 = sbr.rel (0) target = $region17
    $region16: #{snn_forward_pallas.1} parent=1 // pred_region
      _
    $region17: #{snn_forward_pallas.1} parent=1 // pred_fallthru
      _
    // Predicated region
    $region18: #{snn_forward_pallas.1} parent=1 // pred_check
      _
    $region19: #{snn_forward_pallas.1} parent=1 // pred_check_branch
      %22 = sbr.rel (0) target = $region21
    $region20: #{snn_forward_pallas.1} parent=1 // pred_region
      _
    $region21: #{snn_forward_pallas.1} parent=1 // pred_fallthru
      _
    // Predicated region
    $region22: #{snn_forward_pallas.1} parent=1 // pred_check
      _
    $region23: #{snn_forward_pallas.1} parent=1 // pred_check_branch
      %24 = sbr.rel (0) target = $region25
    $region24: #{snn_forward_pallas.1} parent=1 // pred_region
      _
    $region25: #{snn_forward_pallas.1} parent=1 // pred_fallthru
      _
    // Predicated region
    $region26: #{snn_forward_pallas.1} parent=1 // pred_check
      _
    $region27: #{snn_forward_pallas.1} parent=1 // pred_check_branch
      %26 = sbr.rel (0) target = $region29
    $region28: #{snn_forward_pallas.1} parent=1 // pred_region
      _
    $region29: #{snn_forward_pallas.1} parent=1 // pred_fallthru
      _
    %v28 = vld [vmem:[%s0] sm:$0xf]
    %v29 = vld [vmem:[%s1] sm:$0xf]
    %v30 = vld [vmem:[%s1 + $0x4] sm:$0xf]
    %v31 = vld [vmem:[%s1 + $0x8] sm:$0xf]
    %v32 = vld [vmem:[%s1 + $0xc] sm:$0xf]
    %v33 = vld [vmem:[%s1 + $0x10] sm:$0xf]
    %v34 = vld [vmem:[%s1 + $0x14] sm:$0xf]
    %v35 = vld [vmem:[%s1 + $0x18] sm:$0xf]
    %v36 = vld [vmem:[%s1 + $0x1c] sm:$0xf]
    %v37 = vld [vmem:[%s1 + $0x20] sm:$0xf]
    %v38 = vld [vmem:[%s1 + $0x24] sm:$0xf]
    %v39 = vld [vmem:[%s1 + $0x28] sm:$0xf]
    %v40 = vld [vmem:[%s1 + $0x2c] sm:$0xf]
    %v41 = vld [vmem:[%s1 + $0x30] sm:$0xf]
    %v42 = vld [vmem:[%s1 + $0x34] sm:$0xf]
    %v43 = vld [vmem:[%s1 + $0x38] sm:$0xf]
    %v44 = vld [vmem:[%s1 + $0x3c] sm:$0xf]
    %v45 = vld [vmem:[%s2] sm:$0x1]
    %v47 = vlaneseq
    %v48 = vshrl.u32 %v47, 7
    %v49 = vsub.s32 0, %v48
    %v50 = vrot.slane %v45, %v49
    %v68 = vunpack.c.l.b16 %v29
    %v69 = vunpack.c.l.b16 %v30
    %v70 = vunpack.c.l.b16 %v31
    %v71 = vunpack.c.l.b16 %v32
    %v72 = vunpack.c.l.b16 %v33
    %v73 = vunpack.c.l.b16 %v34
    %v74 = vunpack.c.l.b16 %v35
    %v75 = vunpack.c.l.b16 %v36
    %v76 = vunpack.c.l.b16 %v37
    %v77 = vunpack.c.l.b16 %v38
    %v78 = vunpack.c.l.b16 %v39
    %v79 = vunpack.c.l.b16 %v40
    %v80 = vunpack.c.l.b16 %v41
    %v81 = vunpack.c.l.b16 %v42
    %v82 = vunpack.c.l.b16 %v43
    %v83 = vunpack.c.l.b16 %v44
    %v84 = vpack.c.b16 %v69, %v68
    %v85 = vpack.c.b16 %v71, %v70
    %v86 = vpack.c.b16 %v73, %v72
    %v87 = vpack.c.b16 %v75, %v74
    %v88 = vpack.c.b16 %v77, %v76
    %v89 = vpack.c.b16 %v79, %v78
    %v90 = vpack.c.b16 %v81, %v80
    %v91 = vpack.c.b16 %v83, %v82
    %100 = vmatprep.subr.bf16.mxu0 0
    %101 = vmatpush1.bf16.msra.mxu0 %v84
    %102 = vmatprep.subr.bf16.mxu0 0
    %103 = vmatpush1.bf16.msra.mxu0 %v85
    %104 = vmatprep.subr.bf16.mxu0 0
    %105 = vmatpush1.bf16.msra.mxu0 %v86
    %106 = vmatprep.subr.bf16.mxu0 0
    %107 = vmatpush1.bf16.msra.mxu0 %v87
    %108 = vmatprep.subr.bf16.mxu0 0
    %109 = vmatpush1.bf16.msra.mxu0 %v88
    %110 = vmatprep.subr.bf16.mxu0 0
    %111 = vmatpush1.bf16.msra.mxu0 %v89
    %112 = vmatprep.subr.bf16.mxu0 0
    %113 = vmatpush1.bf16.msra.mxu0 %v90
    %114 = vmatprep.subr.bf16.mxu0 0
    %115 = vmatpush1.bf16.msra.mxu0 %v91
    %116 = vmatprep.subr.bf16.mxu0 0
    %117 = vmatpush1.bf16.msra.mxu0 0
    %118 = vmatprep.subr.bf16.mxu0 0
    %119 = vmatpush1.bf16.msra.mxu0 0
    %120 = vmatprep.subr.bf16.mxu0 0
    %121 = vmatpush1.bf16.msra.mxu0 0
    %122 = vmatprep.subr.bf16.mxu0 0
    %123 = vmatpush1.bf16.msra.mxu0 0
    %124 = vmatprep.subr.bf16.mxu0 0
    %125 = vmatpush1.bf16.msra.mxu0 0
    %126 = vmatprep.subr.bf16.mxu0 0
    %127 = vmatpush1.bf16.msra.mxu0 0
    %128 = vmatprep.subr.bf16.mxu0 0
    %129 = vmatpush1.bf16.msra.mxu0 0
    %130 = vmatprep.subr.bf16.mxu0 0
    %131 = vmatpush1.bf16.msra.mxu0 0
    %132 = vmatprep.mubr.bf16.mxu0 0
    %133 = vmatmul.mubr.bf16.gmra.mrb[0].mxu0 %v28
    %v134 = vpop.f32.mrb[0].mxu0
    %v135 = vadd.f32 %v50, %v134
    %v136 = vpop.f32.mrb[0].mxu0
    %v137 = vpop.f32.mrb[0].mxu0
    %v138 = vpop.f32.mrb[0].mxu0
    %139 = vdwg.mxu0
    %v140 = vmin.f32 %v135, 0.0
    %v141 = vmul.f32 %v140, 1.442695
    %v142 = vpow.pop %v141
    %v143 = vsub.f32 %v142, 1.0
    %v144 = vmul.f32 %v143, 1.6732632
    %vm145 = vcmp.gt.f32.partialorder %v135, 0.0
    %v146 = vsel %vm145, %v135, %v144
    %v147 = vmul.f32 %v146, 1.050701
    %v148 = vpack.c.bf16 %v147, %v147
    %v149 = vld [vmem:[%s3] sm:$0xf]
    %v150 = vld [vmem:[%s3 + $0x4] sm:$0xf]
    %v151 = vld [vmem:[%s3 + $0x8] sm:$0xf]
    %v152 = vld [vmem:[%s3 + $0xc] sm:$0xf]
    %v153 = vld [vmem:[%s3 + $0x10] sm:$0xf]
    %v154 = vld [vmem:[%s3 + $0x14] sm:$0xf]
    %v155 = vld [vmem:[%s3 + $0x18] sm:$0xf]
    %v156 = vld [vmem:[%s3 + $0x1c] sm:$0xf]
    %v157 = vld [vmem:[%s3 + $0x20] sm:$0xf]
    %v158 = vld [vmem:[%s3 + $0x24] sm:$0xf]
    %v159 = vld [vmem:[%s3 + $0x28] sm:$0xf]
    %v160 = vld [vmem:[%s3 + $0x2c] sm:$0xf]
    %v161 = vld [vmem:[%s3 + $0x30] sm:$0xf]
    %v162 = vld [vmem:[%s3 + $0x34] sm:$0xf]
    %v163 = vld [vmem:[%s3 + $0x38] sm:$0xf]
    %v164 = vld [vmem:[%s3 + $0x3c] sm:$0xf]
    %v165 = vld [vmem:[%s4] sm:$0x1]
    %v167 = vlaneseq
    %v168 = vshrl.u32 %v167, 7
    %v169 = vsub.s32 0, %v168
    %v170 = vrot.slane %v165, %v169
    %v188 = vunpack.c.l.b16 %v149
    %v189 = vunpack.c.l.b16 %v150
    %v190 = vunpack.c.l.b16 %v151
    %v191 = vunpack.c.l.b16 %v152
    %v192 = vunpack.c.l.b16 %v153
    %v193 = vunpack.c.l.b16 %v154
    %v194 = vunpack.c.l.b16 %v155
    %v195 = vunpack.c.l.b16 %v156
    %v196 = vunpack.c.l.b16 %v157
    %v197 = vunpack.c.l.b16 %v158
    %v198 = vunpack.c.l.b16 %v159
    %v199 = vunpack.c.l.b16 %v160
    %v200 = vunpack.c.l.b16 %v161
    %v201 = vunpack.c.l.b16 %v162
    %v202 = vunpack.c.l.b16 %v163
    %v203 = vunpack.c.l.b16 %v164
    %v204 = vpack.c.b16 %v189, %v188
    %v205 = vpack.c.b16 %v191, %v190
    %v206 = vpack.c.b16 %v193, %v192
    %v207 = vpack.c.b16 %v195, %v194
    %v208 = vpack.c.b16 %v197, %v196
    %v209 = vpack.c.b16 %v199, %v198
    %v210 = vpack.c.b16 %v201, %v200
    %v211 = vpack.c.b16 %v203, %v202
    %220 = vmatprep.subr.bf16.mxu0 0
    %221 = vmatpush1.bf16.msra.mxu0 %v204
    %222 = vmatprep.subr.bf16.mxu0 0
    %223 = vmatpush1.bf16.msra.mxu0 %v205
    %224 = vmatprep.subr.bf16.mxu0 0
    %225 = vmatpush1.bf16.msra.mxu0 %v206
    %226 = vmatprep.subr.bf16.mxu0 0
    %227 = vmatpush1.bf16.msra.mxu0 %v207
    %228 = vmatprep.subr.bf16.mxu0 0
    %229 = vmatpush1.bf16.msra.mxu0 %v208
    %230 = vmatprep.subr.bf16.mxu0 0
    %231 = vmatpush1.bf16.msra.mxu0 %v209
    %232 = vmatprep.subr.bf16.mxu0 0
    %233 = vmatpush1.bf16.msra.mxu0 %v210
    %234 = vmatprep.subr.bf16.mxu0 0
    %235 = vmatpush1.bf16.msra.mxu0 %v211
    %236 = vmatprep.subr.bf16.mxu0 0
    %237 = vmatpush1.bf16.msra.mxu0 0
    %238 = vmatprep.subr.bf16.mxu0 0
    %239 = vmatpush1.bf16.msra.mxu0 0
    %240 = vmatprep.subr.bf16.mxu0 0
    %241 = vmatpush1.bf16.msra.mxu0 0
    %242 = vmatprep.subr.bf16.mxu0 0
    %243 = vmatpush1.bf16.msra.mxu0 0
    %244 = vmatprep.subr.bf16.mxu0 0
    %245 = vmatpush1.bf16.msra.mxu0 0
    %246 = vmatprep.subr.bf16.mxu0 0
    %247 = vmatpush1.bf16.msra.mxu0 0
    %248 = vmatprep.subr.bf16.mxu0 0
    %249 = vmatpush1.bf16.msra.mxu0 0
    %250 = vmatprep.subr.bf16.mxu0 0
    %251 = vmatpush1.bf16.msra.mxu0 0
    %252 = vmatprep.mubr.bf16.mxu0 0
    %253 = vmatmul.mubr.bf16.gmra.mrb[0].mxu0 %v148
    %v254 = vpop.f32.mrb[0].mxu0
    %v255 = vadd.f32 %v170, %v254
    %v256 = vpop.f32.mrb[0].mxu0
    %v257 = vpop.f32.mrb[0].mxu0
    %v258 = vpop.f32.mrb[0].mxu0
    %259 = vdwg.mxu0
    %v260 = vmin.f32 %v255, 0.0
    %v261 = vmul.f32 %v260, 1.442695
    %v262 = vpow.pop %v261
    %v263 = vsub.f32 %v262, 1.0
    %v264 = vmul.f32 %v263, 1.6732632
    %vm265 = vcmp.gt.f32.partialorder %v255, 0.0
    %v266 = vsel %vm265, %v255, %v264
    %v267 = vmul.f32 %v266, 1.050701
    %v268 = vpack.c.bf16 %v267, %v267
    %v269 = vld [vmem:[%s5] sm:$0xf]
    %v270 = vld [vmem:[%s5 + $0x4] sm:$0xf]
    %v271 = vld [vmem:[%s5 + $0x8] sm:$0xf]
    %v272 = vld [vmem:[%s5 + $0xc] sm:$0xf]
    %v273 = vld [vmem:[%s5 + $0x10] sm:$0xf]
    %v274 = vld [vmem:[%s5 + $0x14] sm:$0xf]
    %v275 = vld [vmem:[%s5 + $0x18] sm:$0xf]
    %v276 = vld [vmem:[%s5 + $0x1c] sm:$0xf]
    %v277 = vld [vmem:[%s5 + $0x20] sm:$0xf]
    %v278 = vld [vmem:[%s5 + $0x24] sm:$0xf]
    %v279 = vld [vmem:[%s5 + $0x28] sm:$0xf]
    %v280 = vld [vmem:[%s5 + $0x2c] sm:$0xf]
    %v281 = vld [vmem:[%s5 + $0x30] sm:$0xf]
    %v282 = vld [vmem:[%s5 + $0x34] sm:$0xf]
    %v283 = vld [vmem:[%s5 + $0x38] sm:$0xf]
    %v284 = vld [vmem:[%s5 + $0x3c] sm:$0xf]
    %v285 = vld [vmem:[%s6] sm:$0x1]
    %v287 = vlaneseq
    %v288 = vshrl.u32 %v287, 7
    %v289 = vsub.s32 0, %v288
    %v290 = vrot.slane %v285, %v289
    %v308 = vunpack.c.l.b16 %v269
    %v309 = vunpack.c.l.b16 %v270
    %v310 = vunpack.c.l.b16 %v271
    %v311 = vunpack.c.l.b16 %v272
    %v312 = vunpack.c.l.b16 %v273
    %v313 = vunpack.c.l.b16 %v274
    %v314 = vunpack.c.l.b16 %v275
    %v315 = vunpack.c.l.b16 %v276
    %v316 = vunpack.c.l.b16 %v277
    %v317 = vunpack.c.l.b16 %v278
    %v318 = vunpack.c.l.b16 %v279
    %v319 = vunpack.c.l.b16 %v280
    %v320 = vunpack.c.l.b16 %v281
    %v321 = vunpack.c.l.b16 %v282
    %v322 = vunpack.c.l.b16 %v283
    %v323 = vunpack.c.l.b16 %v284
    %v324 = vpack.c.b16 %v309, %v308
    %v325 = vpack.c.b16 %v311, %v310
    %v326 = vpack.c.b16 %v313, %v312
    %v327 = vpack.c.b16 %v315, %v314
    %v328 = vpack.c.b16 %v317, %v316
    %v329 = vpack.c.b16 %v319, %v318
    %v330 = vpack.c.b16 %v321, %v320
    %v331 = vpack.c.b16 %v323, %v322
    %340 = vmatprep.subr.bf16.mxu0 0
    %341 = vmatpush1.bf16.msra.mxu0 %v324
    %342 = vmatprep.subr.bf16.mxu0 0
    %343 = vmatpush1.bf16.msra.mxu0 %v325
    %344 = vmatprep.subr.bf16.mxu0 0
    %345 = vmatpush1.bf16.msra.mxu0 %v326
    %346 = vmatprep.subr.bf16.mxu0 0
    %347 = vmatpush1.bf16.msra.mxu0 %v327
    %348 = vmatprep.subr.bf16.mxu0 0
    %349 = vmatpush1.bf16.msra.mxu0 %v328
    %350 = vmatprep.subr.bf16.mxu0 0
    %351 = vmatpush1.bf16.msra.mxu0 %v329
    %352 = vmatprep.subr.bf16.mxu0 0
    %353 = vmatpush1.bf16.msra.mxu0 %v330
    %354 = vmatprep.subr.bf16.mxu0 0
    %355 = vmatpush1.bf16.msra.mxu0 %v331
    %356 = vmatprep.subr.bf16.mxu0 0
    %357 = vmatpush1.bf16.msra.mxu0 0
    %358 = vmatprep.subr.bf16.mxu0 0
    %359 = vmatpush1.bf16.msra.mxu0 0
    %360 = vmatprep.subr.bf16.mxu0 0
    %361 = vmatpush1.bf16.msra.mxu0 0
    %362 = vmatprep.subr.bf16.mxu0 0
    %363 = vmatpush1.bf16.msra.mxu0 0
    %364 = vmatprep.subr.bf16.mxu0 0
    %365 = vmatpush1.bf16.msra.mxu0 0
    %366 = vmatprep.subr.bf16.mxu0 0
    %367 = vmatpush1.bf16.msra.mxu0 0
    %368 = vmatprep.subr.bf16.mxu0 0
    %369 = vmatpush1.bf16.msra.mxu0 0
    %370 = vmatprep.subr.bf16.mxu0 0
    %371 = vmatpush1.bf16.msra.mxu0 0
    %372 = vmatprep.mubr.bf16.mxu0 0
    %373 = vmatmul.mubr.bf16.gmra.mrb[0].mxu0 %v268
    %v374 = vpop.f32.mrb[0].mxu0
    %v375 = vadd.f32 %v290, %v374
    %v376 = vpop.f32.mrb[0].mxu0
    %v377 = vpop.f32.mrb[0].mxu0
    %v378 = vpop.f32.mrb[0].mxu0
    %379 = vdwg.mxu0
    %380 = vst [vmem:[#allocation2] sm:$0xff] %v375
    // Predicated region
    $region30: #{snn_forward_pallas.1} parent=1 // pred_check
      _
    $region31: #{snn_forward_pallas.1} parent=1 // pred_check_branch
      %382 = sbr.rel (0) target = $region33
    $region32: #{snn_forward_pallas.1} parent=1 // pred_region
      %s384 = ssub.s32 128, 128
      %385 = vsyncadd [#allocation3], %s384
      %s387 = sshll.u32 [#allocation2], 4
      %s388 = int_to_ptr.vmem [resolvable:$true] %s387
      %390 = dma.vmem_to_hbm [thread:$0]  %s388, 128, %s7, [#allocation3]
    $region33: #{snn_forward_pallas.1} parent=1 // pred_fallthru
      _
    // Predicated region
    $region34: #{snn_forward_pallas.1} parent=1 // pred_check
      _
    $region35: #{snn_forward_pallas.1} parent=1 // pred_check_branch
      %392 = sbr.rel (0) target = $region37
    $region36: #{snn_forward_pallas.1} parent=1 // pred_region
      %393 = dma.done [#allocation3], 128
    $region37: #{snn_forward_pallas.1} parent=1 // pred_fallthru
      _
    %394 = vsyncpa [#allocation3], 1

</llo_original>
